<compile_context>
chip_gen: v5e
topology: v5e:2x2
jax: 0.10.0
libtpu: 0.0.40
codegen_flags: <defaults>
</compile_context>

<pallas_src>
import jax
import jax.numpy as jnp
from jax import lax
from jax.experimental import pallas as pl
from jax.experimental.pallas import tpu as pltpu


def _round_up(x, m):
    return ((x + m - 1) // m) * m


def final_layer_kernel(x_ref, mul_ref, add_ref, w_ref, b_ref, o_ref):
    """One (batch, seq-tile) grid step, channel-major orientation.

    x_ref  : (1, D, tS)   activation tile (native NCDHW layout, tokens on lanes)
    mul_ref: (1, D, 1)    per-batch (1 + shift) vector
    add_ref: (1, D, 1)    per-batch scale vector
    w_ref  : (P, D)       projection weight, transposed + bf16, resident
    b_ref  : (P, 1)       projection bias (f32), resident
    o_ref  : (1, P, tS)   output tile (already in the final (B, P, S) layout)
    """
    D = x_ref.shape[1]
    eps = 1e-6

    x = x_ref[0].astype(jnp.float32)                       # (D, tS)

    # LayerNorm (eps=1e-6, no affine): single-pass moments over channels
    # (sublane axis); variance clamped before rsqrt (cancellation guard).
    inv_d = 1.0 / D
    mean = jnp.sum(x, axis=0, keepdims=True) * inv_d       # (1, tS)
    mean_sq = jnp.sum(x * x, axis=0, keepdims=True) * inv_d
    var = jnp.maximum(mean_sq - mean * mean, 0.0)
    rstd = lax.rsqrt(var + eps)                            # (1, tS)

    # Fused LN + modulate:  mod = x * a + b
    #   a = (1 + shift) * rstd,  b = scale - mean * a
    mul = mul_ref[0].astype(jnp.float32)                   # (D, 1)
    add = add_ref[0].astype(jnp.float32)                   # (D, 1)
    a = mul * rstd                                         # (D, tS)
    b = add - mean * a                                     # (D, tS)
    # (v7x note: with bf16 activations this FMA chain could run in bf16 to
    #  halve VALU work; kept in f32 here — v5e has no bf16 VPU.)
    mod = (x * a + b).astype(w_ref.dtype)                  # bf16 MXU operand

    # Projection: (P, D) @ (D, tS) -> (P, tS), f32 accumulation on the MXU.
    out = jnp.dot(w_ref[...], mod, preferred_element_type=jnp.float32)
    out = out + b_ref[...]                                 # (P, 1) broadcast
    o_ref[0] = out.astype(o_ref.dtype)


def final_layer_forward(x, timesteps, params, patch_lw, patch_t, out_channels,
                        *, tile_s=512):
    """x: (B, D, T, H, W), timesteps: (B, D) -> (B, P, T, H, W), P = p*p*pt*C."""
    B, D, T, H, W = x.shape
    S = T * H * W
    P = patch_lw * patch_lw * patch_t * out_channels
    out_dtype = x.dtype
    isz = lambda d: jnp.dtype(d).itemsize

    # ---- adaLN branch in plain JAX (M=B skinny matmul; keeps the (D, 2D)
    #      weight out of VMEM and out of the per-tile loop).
    ts = timesteps.astype(jnp.float32)
    silu = ts * jax.nn.sigmoid(ts)
    emb = (silu @ params["ada_w"].astype(jnp.float32)
           + params["ada_b"].astype(jnp.float32))          # (B, 2D)
    # torch: shift, scale = emb.chunk(2); modulate(norm, shift, scale) with
    # signature modulate(x, scale, shift) => chunk 0 multiplicative (1 + .),
    # chunk 1 additive (matches the module exactly).
    mul = (1.0 + emb[:, :D]).reshape(B, D, 1)
    add = emb[:, D:].reshape(B, D, 1)

    # ---- projection weight transposed to (P, D) and forced to bf16 (bf16 MXU
    #      path, halved resident VMEM); bias stays f32 (tiny, added post-acc).
    wl = jnp.transpose(params["lin_w"]).astype(jnp.bfloat16)   # (P, D)
    bl = params["lin_b"].astype(jnp.float32).reshape(P, 1)

    # ---- generation-aware sequence tile (lane axis) + VMEM budget.
    try:
        vmem_cap = pltpu.get_tpu_info().vmem_capacity_bytes
    except Exception:
        vmem_cap = 64 << 20                      # conservative (v7x per-core)

    def tile_bytes(ts_):
        blocks = 2 * (D * ts_ * isz(x.dtype)            # x tile, double-buffered
                      + P * ts_ * isz(out_dtype)        # out tile
                      + 2 * D * 4)                      # mul / add vectors
        resident = P * D * isz(wl.dtype) + P * 4
        temps = D * ts_ * (3 * 4 + 2) + P * ts_ * 4     # f32 x/a/b + bf16 mod + f32 acc
        return blocks + resident + temps + (2 << 20)    # Mosaic scratch headroom

    tS = min(int(tile_s), S)
    if tS < S:
        tS = max(128, (tS // 128) * 128)            # lane-dense multi-tile case
    while tS > 128 and tile_bytes(tS) > int(0.7 * vmem_cap):
        tS = max(128, ((tS // 2) // 128) * 128)     # e.g. v7x (64 MiB): 512 -> 256

    if tS >= S:
        tS, S_pad = S, S                            # single block: full-dim lane axis
    else:
        S_pad = _round_up(S, tS)

    # ---- channel-major token view: FREE reshape of the native NCDHW layout.
    x_cs = x.reshape(B, D, S)
    if S_pad != S:
        x_cs = jnp.pad(x_cs, ((0, 0), (0, 0), (0, S_pad - S)))

    vmem_limit = max(4 << 20,
                     int(min(int(0.9 * vmem_cap), tile_bytes(tS) + (4 << 20))))

    cost = pl.CostEstimate(
        flops=2 * B * S_pad * D * P + 10 * B * S_pad * D,
        transcendentals=B * S_pad,                          # rsqrt per token
        bytes_accessed=(B * S_pad * D * isz(x.dtype)
                        + B * S_pad * P * isz(out_dtype)
                        + P * D * isz(wl.dtype)),
    )

    out_cs = pl.pallas_call(
        final_layer_kernel,
        out_shape=jax.ShapeDtypeStruct((B, P, S_pad), out_dtype),
        grid_spec=pltpu.PrefetchScalarGridSpec(
            num_scalar_prefetch=0,
            grid=(B, S_pad // tS),
            in_specs=[
                pl.BlockSpec((1, D, tS), lambda b, s: (b, 0, s)),
                pl.BlockSpec((1, D, 1), lambda b, s: (b, 0, 0)),
                pl.BlockSpec((1, D, 1), lambda b, s: (b, 0, 0)),
                pl.BlockSpec((P, D), lambda b, s: (0, 0)),      # resident weight
                pl.BlockSpec((P, 1), lambda b, s: (0, 0)),      # resident bias
            ],
            out_specs=pl.BlockSpec((1, P, tS), lambda b, s: (b, 0, s)),
        ),
        compiler_params=pltpu.CompilerParams(
            dimension_semantics=("parallel", "parallel"),
            vmem_limit_bytes=vmem_limit,
        ),
        cost_estimate=cost,
    )(x_cs, mul, add, wl, bl)

    # ---- already (B, P, S): strip seq padding (if any) and reshape for free.
    if S_pad != S:
        out_cs = out_cs[:, :, :S]
    return out_cs.reshape(B, P, T, H, W)


def reference_forward(x, timesteps, params, patch_lw, patch_t, out_channels):
    B, D, T, H, W = x.shape
    xt = jnp.transpose(x, (0, 2, 3, 4, 1)).reshape(B, -1, D).astype(jnp.float32)
    ts = timesteps.astype(jnp.float32)
    silu = ts * jax.nn.sigmoid(ts)
    emb = (silu @ params["ada_w"].astype(jnp.float32)
           + params["ada_b"].astype(jnp.float32))
    shift, scale = emb[:, :D], emb[:, D:]        # torch: shift, scale = chunk(2)
    mean = jnp.mean(xt, axis=-1, keepdims=True)
    var = jnp.mean((xt - mean) ** 2, axis=-1, keepdims=True)
    normed = (xt - mean) / jnp.sqrt(var + 1e-6)
    # modulate(norm, shift, scale) with signature modulate(x, scale, shift):
    mod = normed * (1.0 + shift[:, None, :]) + scale[:, None, :]
    out = jnp.dot(mod, params["lin_w"].astype(jnp.float32),
                  precision=jax.lax.Precision.HIGHEST)
    out = out + params["lin_b"].astype(jnp.float32)
    P = patch_lw * patch_lw * patch_t * out_channels
    return jnp.transpose(out.reshape(B, T, H, W, P), (0, 4, 1, 2, 3)).astype(x.dtype)


if __name__ == "__main__":
    # FinalLayer(hidden_size=32, patch_lw=2, patch_t=1, out_channels=4)
    B, D, T, H, W = 2, 32, 2, 8, 16              # S = 256 tokens
    patch_lw, patch_t, out_channels = 2, 1, 4
    P = patch_lw * patch_lw * patch_t * out_channels

    key = jax.random.PRNGKey(0)
    k1, k2, k3, k4, k5, k6 = jax.random.split(key, 6)

    x = jax.random.normal(k1, (B, D, T, H, W), dtype=jnp.float32)
    timesteps = jax.random.normal(k2, (B, D), dtype=jnp.float32)

    # NOTE: the PyTorch module zero-initializes the adaLN linear; small random
    # weights are used here so the modulation path is actually exercised.
    params = {
        "ada_w": jax.random.normal(k3, (D, 2 * D), dtype=jnp.float32) * 0.02,
        "ada_b": jax.random.normal(k4, (2 * D,), dtype=jnp.float32) * 0.02,
        "lin_w": jax.random.normal(k5, (D, P), dtype=jnp.float32) * 0.05,
        "lin_b": jax.random.normal(k6, (P,), dtype=jnp.float32) * 0.05,
    }

    # tile_s=128 exercises a multi-step sequence grid: S=256 -> grid (2, 2).
    out = final_layer_forward(x, timesteps, params, patch_lw, patch_t,
                              out_channels, tile_s=128)
    out = jax.block_until_ready(out)

    ref = reference_forward(x, timesteps, params, patch_lw, patch_t, out_channels)
    assert out.shape == (B, P, T, H, W), out.shape
    # Kernel uses bf16 weights / bf16 MXU operands (f32 accumulation); compare
    # against the pure-f32 reference with a bf16-quantization-sized tolerance.
    err = float(jnp.max(jnp.abs(out - ref)))
    assert err < 1e-2, f"mismatch vs reference: max abs err {err}"

    print("KERNEL_OK")
</pallas_src>

<mosaic_0001>
module attributes {stable_mosaic.version = 11 : i64} {
  func.func @final_layer_kernel(%arg0: i32, %arg1: i32, %arg2: memref<1x32x128xf32, #tpu.memory_space<vmem>>, %arg3: memref<1x32x1xf32, #tpu.memory_space<vmem>>, %arg4: memref<1x32x1xf32, #tpu.memory_space<vmem>>, %arg5: memref<16x32xbf16, #tpu.memory_space<vmem>>, %arg6: memref<16x1xf32, #tpu.memory_space<vmem>>, %arg7: memref<1x16x128xf32, #tpu.memory_space<vmem>>) attributes {dimension_semantics = [#tpu.dimension_semantics<parallel>, #tpu.dimension_semantics<parallel>], iteration_bounds = array<i64: 2, 2>, scalar_prefetch = 0 : i64, scratch_operands = 0 : i64, tpu.core_type = #tpu.core_type<tc>, window_params = [{transform_indices = @transform_0, window_bounds = array<i64: 1, 32, 128>}, {transform_indices = @transform_1, window_bounds = array<i64: 1, 32, 1>}, {transform_indices = @transform_2, window_bounds = array<i64: 1, 32, 1>}, {pipeline_mode = #tpu.pipeline_mode<synchronous>, transform_indices = @transform_3, window_bounds = array<i64: 16, 32>}, {pipeline_mode = #tpu.pipeline_mode<synchronous>, transform_indices = @transform_4, window_bounds = array<i64: 16, 1>}, {transform_indices = @transform_5, window_bounds = array<i64: 1, 16, 128>}]} {
    %c0 = arith.constant 0 : index
    %c0_0 = arith.constant 0 : index
    %c0_1 = arith.constant 0 : index
    %0 = vector.load %arg2[%c0, %c0_0, %c0_1] : memref<1x32x128xf32, #tpu.memory_space<vmem>>, vector<1x32x128xf32>
    %1 = vector.shape_cast %0 : vector<1x32x128xf32> to vector<32x128xf32>
    %cst = arith.constant dense<0.000000e+00> : vector<128xf32>
    %2 = vector.multi_reduction <add>, %1, %cst [0] : vector<32x128xf32> to vector<128xf32>
    %3 = vector.shape_cast %2 : vector<128xf32> to vector<1x128xf32>
    %cst_2 = arith.constant 3.125000e-02 : f32
    %4 = vector.broadcast %cst_2 : f32 to vector<1x128xf32>
    %5 = arith.mulf %3, %4 : vector<1x128xf32>
    %6 = arith.mulf %1, %1 : vector<32x128xf32>
    %cst_3 = arith.constant dense<0.000000e+00> : vector<128xf32>
    %7 = vector.multi_reduction <add>, %6, %cst_3 [0] : vector<32x128xf32> to vector<128xf32>
    %8 = vector.shape_cast %7 : vector<128xf32> to vector<1x128xf32>
    %cst_4 = arith.constant 3.125000e-02 : f32
    %9 = vector.broadcast %cst_4 : f32 to vector<1x128xf32>
    %10 = arith.mulf %8, %9 : vector<1x128xf32>
    %11 = arith.mulf %5, %5 : vector<1x128xf32>
    %12 = arith.subf %10, %11 : vector<1x128xf32>
    %cst_5 = arith.constant 0.000000e+00 : f32
    %13 = vector.broadcast %cst_5 : f32 to vector<1x128xf32>
    %14 = arith.maximumf %12, %13 : vector<1x128xf32>
    %cst_6 = arith.constant 9.99999997E-7 : f32
    %15 = vector.broadcast %cst_6 : f32 to vector<1x128xf32>
    %16 = arith.addf %14, %15 : vector<1x128xf32>
    %17 = math.rsqrt %16 : vector<1x128xf32>
    %c0_7 = arith.constant 0 : index
    %c0_8 = arith.constant 0 : index
    %c0_9 = arith.constant 0 : index
    %18 = vector.load %arg3[%c0_7, %c0_8, %c0_9] : memref<1x32x1xf32, #tpu.memory_space<vmem>>, vector<1x32x1xf32>
    %19 = vector.shape_cast %18 : vector<1x32x1xf32> to vector<32x1xf32>
    %c0_10 = arith.constant 0 : index
    %c0_11 = arith.constant 0 : index
    %c0_12 = arith.constant 0 : index
    %20 = vector.load %arg4[%c0_10, %c0_11, %c0_12] : memref<1x32x1xf32, #tpu.memory_space<vmem>>, vector<1x32x1xf32>
    %21 = vector.shape_cast %20 : vector<1x32x1xf32> to vector<32x1xf32>
    %22 = vector.broadcast %19 : vector<32x1xf32> to vector<32x128xf32>
    %23 = vector.broadcast %17 : vector<1x128xf32> to vector<32x128xf32>
    %24 = arith.mulf %22, %23 : vector<32x128xf32>
    %25 = vector.broadcast %5 : vector<1x128xf32> to vector<32x128xf32>
    %26 = arith.mulf %25, %24 : vector<32x128xf32>
    %27 = vector.broadcast %21 : vector<32x1xf32> to vector<32x128xf32>
    %28 = arith.subf %27, %26 : vector<32x128xf32>
    %29 = arith.mulf %1, %24 : vector<32x128xf32>
    %30 = arith.addf %29, %28 : vector<32x128xf32>
    %31 = arith.truncf %30 : vector<32x128xf32> to vector<32x128xbf16>
    %c0_13 = arith.constant 0 : index
    %c0_14 = arith.constant 0 : index
    %32 = vector.load %arg5[%c0_13, %c0_14] : memref<16x32xbf16, #tpu.memory_space<vmem>>, vector<16x32xbf16>
    %cst_15 = arith.constant dense<0.000000e+00> : vector<16x128xf32>
    %33 = tpu.matmul %32, %31, %cst_15 {dimension_numbers = #tpu.dot_dimension_numbers<[1], [0], [0], [1], [0, 0, 1, 1], [], []>} : vector<16x32xbf16>, vector<32x128xbf16>, vector<16x128xf32> -> vector<16x128xf32>
    %c0_16 = arith.constant 0 : index
    %c0_17 = arith.constant 0 : index
    %34 = vector.load %arg6[%c0_16, %c0_17] : memref<16x1xf32, #tpu.memory_space<vmem>>, vector<16x1xf32>
    %35 = vector.broadcast %34 : vector<16x1xf32> to vector<16x128xf32>
    %36 = arith.addf %33, %35 : vector<16x128xf32>
    %c0_18 = arith.constant 0 : index
    %c0_19 = arith.constant 0 : index
    %c0_20 = arith.constant 0 : index
    %37 = vector.load %arg7[%c0_18, %c0_19, %c0_20] : memref<1x16x128xf32, #tpu.memory_space<vmem>>, vector<1x16x128xf32>
    %38 = vector.shape_cast %37 : vector<1x16x128xf32> to vector<16x128xf32>
    %39 = vector.shape_cast %36 : vector<16x128xf32> to vector<1x16x128xf32>
    tpu.vector_store %arg7[%c0_18, %c0_19, %c0_20], %39 {strides = array<i32>} : memref<1x16x128xf32, #tpu.memory_space<vmem>>, vector<1x16x128xf32>,
    return
  }
  func.func @transform_0(%arg0: i32, %arg1: i32) -> (i32, i32, i32) {
    %c0_i32 = arith.constant 0 : i32
    %c0_i32_0 = arith.constant 0 : i32
    return %arg0, %c0_i32, %arg1 : i32, i32, i32
  }
  func.func @transform_1(%arg0: i32, %arg1: i32) -> (i32, i32, i32) {
    %c0_i32 = arith.constant 0 : i32
    %c0_i32_0 = arith.constant 0 : i32
    %c0_i32_1 = arith.constant 0 : i32
    return %arg0, %c0_i32, %c0_i32_0 : i32, i32, i32
  }
  func.func @transform_2(%arg0: i32, %arg1: i32) -> (i32, i32, i32) {
    %c0_i32 = arith.constant 0 : i32
    %c0_i32_0 = arith.constant 0 : i32
    %c0_i32_1 = arith.constant 0 : i32
    return %arg0, %c0_i32, %c0_i32_0 : i32, i32, i32
  }
  func.func @transform_3(%arg0: i32, %arg1: i32) -> (i32, i32) {
    %c0_i32 = arith.constant 0 : i32
    %c0_i32_0 = arith.constant 0 : i32
    %c0_i32_1 = arith.constant 0 : i32
    return %c0_i32, %c0_i32_0 : i32, i32
  }
  func.func @transform_4(%arg0: i32, %arg1: i32) -> (i32, i32) {
    %c0_i32 = arith.constant 0 : i32
    %c0_i32_0 = arith.constant 0 : i32
    %c0_i32_1 = arith.constant 0 : i32
    return %c0_i32, %c0_i32_0 : i32, i32
  }
  func.func @transform_5(%arg0: i32, %arg1: i32) -> (i32, i32, i32) {
    %c0_i32 = arith.constant 0 : i32
    %c0_i32_0 = arith.constant 0 : i32
    return %arg0, %c0_i32, %arg1 : i32, i32, i32
  }
}

</mosaic_0001>

<llo_original>
// kernel: tpu_custom_call.1
$region0: #{tpu_custom_call.1}
  #allocation0 [shape = 'u32[]', space=smem, size = 0x4, offset = 0x4, fixed_abs, tag = 'smem constant byte address 0x4 - core index']
  #allocation1 [shape = 'u32[72,128]{1,0:T(1,128)}', space=vmem, size = 0x9000, scoped, tag = 'internal scratch']
  %s0 = inlined_call_operand.vmem [shape: f32[2,32,256], index: 0, kind: input, shape index: {}]
  %s1 = inlined_call_operand.vmem [shape: f32[2,32,1], index: 1, kind: input, shape index: {}]
  %s2 = inlined_call_operand.vmem [shape: f32[2,32,1], index: 2, kind: input, shape index: {}]
  %s3 = inlined_call_operand.vmem [shape: bf16[16,32], index: 3, kind: input, shape index: {}]
  %s4 = inlined_call_operand.vmem [shape: f32[16,1], index: 4, kind: input, shape index: {}]
  %s5 = inlined_call_operand.hbm [shape: f32[2,16,256], index: 5, kind: output, shape index: {}]
  %s6 = sld [smem:[#allocation0]]
  $region91: #{tpu_custom_call.1} parent=0
    _
  %s8 = ssub.s32 1, %s6
  %s9 = scalar_select 0, %s8, %s6
  $region1: #{tpu_custom_call.1} parent=0
    #allocation2 [shape = 'u8[32768]{0}', space=vmem, size = 0x8000, scoped, tag = 'input window, operand 0']
    #allocation3 [shape = 'u8[16384]{0}', space=vmem, size = 0x4000, scoped, tag = 'output window, operand 0']
    #allocation4 [shape = 's32[2]{0}', space=sflag, size = 0x8, scoped, tag = 'scoped memory for tpu_custom_call.1']
    %10 = vsyncpa [#allocation4], 0
    %s11 = scalar_lea.sflag [#allocation4], 1
    %12 = vsyncpa %s11, 0
    loop: start=0, step=1, limit=6
    $region2: #{tpu_custom_call.1} parent=1 // loop_pre_header
      _
    $region3: #{tpu_custom_call.1} parent=1 // loop_header
      %s14 = sphi 0, %s18
      %p15 = scmp.ge.s32.totalorder %s14, 6
      %s21 = sphi 0, %s33
      %s22 = sphi 0, %s29
      %s23 = sphi 0, %s21
      %s24 = sphi 0, %s22
      %s25 = sphi 0, %s23
      %s26 = sphi 0, %s24
      %s38 = sphi 0, %s40
      %s41 = sphi 0, %s38
      %s42 = sphi 0, %s41
      %s58 = sphi 0, %s42
      %s64 = sphi 0, %s66
      %s67 = sphi 0, %s64
      %s68 = sphi 0, %s67
      %s84 = sphi 0, %s68
      %s90 = sphi 0, %s92
      %s93 = sphi 0, %s90
      %s94 = sphi 0, %s93
      %s110 = sphi 0, %s94
      %s114 = sphi 0, %s114
      %s116 = sphi 0, %s114
      %s117 = sphi 0, %s116
      %s131 = sphi 0, %s117
      %s135 = sphi 0, %s135
      %s137 = sphi 0, %s135
      %s138 = sphi 0, %s137
      %s152 = sphi 0, %s138
      %s160 = sphi 0, %s162
      %s163 = sphi 0, %s160
      %s164 = sphi 0, %s163
      %s180 = sphi 0, %s164
    $region4: #{tpu_custom_call.1} parent=1 // loop_header_branch
      %17 = sbr.rel (%p15) target = $region8
    $region5: #{tpu_custom_call.1} parent=1 // loop_body
      %s19 = ssub.s32 %s14, 1
      %s20 = ssub.s32 %s14, 2
      %s27 = sadd.s32 1, %s22
      %p28 = scmp.ge.s32.totalorder %s27, 2
      %s29 = scalar_select %p28, 0, %s27
      %s30 = sadd.s32 1, %s21
      %s31 = scalar_select %p28, %s30, %s21
      %p32 = scmp.ge.s32.totalorder %s31, 2
      %s33 = scalar_select %p32, 0, %s31
      %s34 = ssub.s32 %s21, %s33
      %s35 = ssub.s32 %s22, %s29
      %s36 = sor.u32 %s34, %s35
      %p37 = scmp.eq.s32.totalorder %s36, 0
      %s39 = sadd.s32 %s38, 1
      %s40 = scalar_select %p37, %s38, %s39
      %p43 = pneg %p37
      %p44 = scmp.eq.s32.totalorder %s14, 3
      %p45 = por %p43, %p44
      %p46 = scmp.ne.s32.totalorder %s38, %s41
      %p47 = scmp.eq.s32.totalorder %s14, 0
      %p48 = por %p46, %p47
      %p49 = scmp.ne.s32.totalorder %s38, %s41
      %p50 = scmp.eq.s32.totalorder %s19, 3
      %p51 = por %p49, %p50
      %p52 = scmp.ne.s32.totalorder %s41, %s42
      %p53 = scmp.eq.s32.totalorder %s19, 0
      %p54 = por %p52, %p53
      %p55 = scmp.ne.s32.totalorder %s41, %s42
      %p56 = scmp.eq.s32.totalorder %s20, 3
      %p57 = por %p55, %p56
      %p59 = scmp.ne.s32.totalorder %s42, %s58
      %p60 = scmp.eq.s32.totalorder %s20, 0
      %p61 = por %p59, %p60
      %s62 = ssub.s32 %s21, %s33
      %p63 = scmp.eq.s32.totalorder %s62, 0
      %s65 = sadd.s32 %s64, 1
      %s66 = scalar_select %p63, %s64, %s65
      %p69 = pneg %p63
      %p70 = scmp.eq.s32.totalorder %s14, 3
      %p71 = por %p69, %p70
      %p72 = scmp.ne.s32.totalorder %s64, %s67
      %p73 = scmp.eq.s32.totalorder %s14, 0
      %p74 = por %p72, %p73
      %p75 = scmp.ne.s32.totalorder %s64, %s67
      %p76 = scmp.eq.s32.totalorder %s19, 3
      %p77 = por %p75, %p76
      %p78 = scmp.ne.s32.totalorder %s67, %s68
      %p79 = scmp.eq.s32.totalorder %s19, 0
      %p80 = por %p78, %p79
      %p81 = scmp.ne.s32.totalorder %s67, %s68
      %p82 = scmp.eq.s32.totalorder %s20, 3
      %p83 = por %p81, %p82
      %p85 = scmp.ne.s32.totalorder %s68, %s84
      %p86 = scmp.eq.s32.totalorder %s20, 0
      %p87 = por %p85, %p86
      %s88 = ssub.s32 %s21, %s33
      %p89 = scmp.eq.s32.totalorder %s88, 0
      %s91 = sadd.s32 %s90, 1
      %s92 = scalar_select %p89, %s90, %s91
      %p95 = pneg %p89
      %p96 = scmp.eq.s32.totalorder %s14, 3
      %p97 = por %p95, %p96
      %p98 = scmp.ne.s32.totalorder %s90, %s93
      %p99 = scmp.eq.s32.totalorder %s14, 0
      %p100 = por %p98, %p99
      %p101 = scmp.ne.s32.totalorder %s90, %s93
      %p102 = scmp.eq.s32.totalorder %s19, 3
      %p103 = por %p101, %p102
      %p104 = scmp.ne.s32.totalorder %s93, %s94
      %p105 = scmp.eq.s32.totalorder %s19, 0
      %p106 = por %p104, %p105
      %p107 = scmp.ne.s32.totalorder %s93, %s94
      %p108 = scmp.eq.s32.totalorder %s20, 3
      %p109 = por %p107, %p108
      %p111 = scmp.ne.s32.totalorder %s94, %s110
      %p112 = scmp.eq.s32.totalorder %s20, 0
      %p113 = por %p111, %p112
      %s115 = sadd.s32 %s114, 1
      %p118 = scmp.eq.s32.totalorder %s14, 3
      %p119 = scmp.ne.s32.totalorder %s114, %s116
      %p120 = scmp.eq.s32.totalorder %s14, 0
      %p121 = por %p119, %p120
      %p122 = scmp.ne.s32.totalorder %s114, %s116
      %p123 = scmp.eq.s32.totalorder %s19, 3
      %p124 = por %p122, %p123
      %p125 = scmp.ne.s32.totalorder %s116, %s117
      %p126 = scmp.eq.s32.totalorder %s19, 0
      %p127 = por %p125, %p126
      %p128 = scmp.ne.s32.totalorder %s116, %s117
      %p129 = scmp.eq.s32.totalorder %s20, 3
      %p130 = por %p128, %p129
      %p132 = scmp.ne.s32.totalorder %s117, %s131
      %p133 = scmp.eq.s32.totalorder %s20, 0
      %p134 = por %p132, %p133
      %s136 = sadd.s32 %s135, 1
      %p139 = scmp.eq.s32.totalorder %s14, 3
      %p140 = scmp.ne.s32.totalorder %s135, %s137
      %p141 = scmp.eq.s32.totalorder %s14, 0
      %p142 = por %p140, %p141
      %p143 = scmp.ne.s32.totalorder %s135, %s137
      %p144 = scmp.eq.s32.totalorder %s19, 3
      %p145 = por %p143, %p144
      %p146 = scmp.ne.s32.totalorder %s137, %s138
      %p147 = scmp.eq.s32.totalorder %s19, 0
      %p148 = por %p146, %p147
      %p149 = scmp.ne.s32.totalorder %s137, %s138
      %p150 = scmp.eq.s32.totalorder %s20, 3
      %p151 = por %p149, %p150
      %p153 = scmp.ne.s32.totalorder %s138, %s152
      %p154 = scmp.eq.s32.totalorder %s20, 0
      %p155 = por %p153, %p154
      %s156 = ssub.s32 %s21, %s33
      %s157 = ssub.s32 %s22, %s29
      %s158 = sor.u32 %s156, %s157
      %p159 = scmp.eq.s32.totalorder %s158, 0
      %s161 = sadd.s32 %s160, 1
      %s162 = scalar_select %p159, %s160, %s161
      %p165 = pneg %p159
      %p166 = scmp.eq.s32.totalorder %s14, 3
      %p167 = por %p165, %p166
      %p168 = scmp.ne.s32.totalorder %s160, %s163
      %p169 = scmp.eq.s32.totalorder %s14, 0
      %p170 = por %p168, %p169
      %p171 = scmp.ne.s32.totalorder %s160, %s163
      %p172 = scmp.eq.s32.totalorder %s19, 3
      %p173 = por %p171, %p172
      %p174 = scmp.ne.s32.totalorder %s163, %s164
      %p175 = scmp.eq.s32.totalorder %s19, 0
      %p176 = por %p174, %p175
      %p177 = scmp.ne.s32.totalorder %s163, %s164
      %p178 = scmp.eq.s32.totalorder %s20, 3
      %p179 = por %p177, %p178
      %p181 = scmp.ne.s32.totalorder %s164, %s180
      %p182 = scmp.eq.s32.totalorder %s20, 0
      %p183 = por %p181, %p182
      %p184 = scmp.le.s32.totalorder 1, %s14
      %p185 = scmp.lt.s32.totalorder %s14, 5
      %p186 = pnand %p184, %p185
      %p187 = pneg %p186
      // Predicated region
      $region9: #{tpu_custom_call.1} parent=5 // pred_check
        _
      $region10: #{tpu_custom_call.1} parent=5 // pred_check_branch
        %189 = sbr.rel (%p186) target = $region12
      $region11: #{tpu_custom_call.1} parent=5 // pred_region
        %s190 = ssub.s32 %s14, 1
        // Predicated region
        $region13: #{tpu_custom_call.1} parent=11 // pred_check
          %p191 = pneg %p127
        $region14: #{tpu_custom_call.1} parent=11 // pred_check_branch
          %193 = sbr.rel (%p191) target = $region16
        $region15: #{tpu_custom_call.1} parent=11 // pred_region
          _
        $region16: #{tpu_custom_call.1} parent=11 // pred_fallthru
          _
        // Predicated region
        $region17: #{tpu_custom_call.1} parent=11 // pred_check
          %p194 = pneg %p148
        $region18: #{tpu_custom_call.1} parent=11 // pred_check_branch
          %196 = sbr.rel (%p194) target = $region20
        $region19: #{tpu_custom_call.1} parent=11 // pred_region
          _
        $region20: #{tpu_custom_call.1} parent=11 // pred_fallthru
          _
      $region12: #{tpu_custom_call.1} parent=5 // pred_fallthru
        _
      %p197 = scmp.lt.s32.totalorder %s14, 4
      // Predicated region
      $region21: #{tpu_custom_call.1} parent=5 // pred_check
        %p198 = pneg %p197
      $region22: #{tpu_custom_call.1} parent=5 // pred_check_branch
        %200 = sbr.rel (%p198) target = $region24
      $region23: #{tpu_custom_call.1} parent=5 // pred_region
        // Predicated region
        $region25: #{tpu_custom_call.1} parent=23 // pred_check
          %p201 = pneg %p48
        $region26: #{tpu_custom_call.1} parent=23 // pred_check_branch
          %203 = sbr.rel (%p201) target = $region28
        $region27: #{tpu_custom_call.1} parent=23 // pred_region
          %s204 = sand.u32 %s38, 1
          %s205 = sand.u32 %s38, 1
          %s206 = smul.addr %s205, 32
          %s207 = scalar_lea.vmem [#allocation2], %s206
          %s208 = smul.addr %s21, 8
          %s209 = sadd.s32 %s22, %s208
          %s210 = smul.addr %s209, 8
          %s211 = scalar_lea.vmem %s0, %s210
          // Predicated region
          $region29: #{tpu_custom_call.1} parent=27 // pred_check
            _
          $region30: #{tpu_custom_call.1} parent=27 // pred_check_branch
            %213 = sbr.rel (0) target = $region32
          $region31: #{tpu_custom_call.1} parent=27 // pred_region
            // Predicated region
            $region33: #{tpu_custom_call.1} parent=31 // pred_check
              _
            $region34: #{tpu_custom_call.1} parent=31 // pred_check_branch
              %215 = sbr.rel (0) target = $region36
            $region35: #{tpu_custom_call.1} parent=31 // pred_region
              // Predicated region
              $region48: #{tpu_custom_call.1} parent=35 // pred_check
                _
              $region49: #{tpu_custom_call.1} parent=35 // pred_check_branch
                %237 = sbr.rel (0) target = $region51
              $region50: #{tpu_custom_call.1} parent=35 // pred_region
                loop: start=0, step=1, limit=1
                $region52: #{tpu_custom_call.1} parent=50 // loop_pre_header
                  _
                $region53: #{tpu_custom_call.1} parent=50 // loop_header
                  %s239 = sphi 0, %s243
                  %p240 = scmp.ge.s32.totalorder %s239, 1
                  %s244 = sphi %s211, %s211
                  %s245 = sphi %s207, %s207
                $region54: #{tpu_custom_call.1} parent=50 // loop_header_branch
                  %242 = sbr.rel (%p240) target = $region58
                $region55: #{tpu_custom_call.1} parent=50 // loop_body
                  %v246 = vld [vmem:[%s244] sm:$0xff]
                  %247 = vst [vmem:[%s245] sm:$0xff] %v246
                  %v248 = vld [vmem:[%s244 + $0x10] sm:$0xff]
                  %249 = vst [vmem:[%s245 + $0x8] sm:$0xff] %v248
                  %v250 = vld [vmem:[%s244 + $0x20] sm:$0xff]
                  %251 = vst [vmem:[%s245 + $0x10] sm:$0xff] %v250
                  %v252 = vld [vmem:[%s244 + $0x30] sm:$0xff]
                  %253 = vst [vmem:[%s245 + $0x18] sm:$0xff] %v252
                $region56: #{tpu_custom_call.1} parent=50 // loop_footer
                  %s243 = sadd.s32 1, %s239
                $region57: #{tpu_custom_call.1} parent=50 // loop_footer_branch
                  %238 = sbr.rel target = $region53
                $region58: #{tpu_custom_call.1} parent=50 // loop_exit
                  _
              $region51: #{tpu_custom_call.1} parent=35 // pred_fallthru
                _
              // Predicated region
              $region59: #{tpu_custom_call.1} parent=35 // pred_check
                _
              $region60: #{tpu_custom_call.1} parent=35 // pred_check_branch
                %255 = sbr.rel target = $region62
              $region61: #{tpu_custom_call.1} parent=35 // pred_region
                _
              $region62: #{tpu_custom_call.1} parent=35 // pred_fallthru
                _
            $region36: #{tpu_custom_call.1} parent=31 // pred_fallthru
              _
            // Predicated region
            $region37: #{tpu_custom_call.1} parent=31 // pred_check
              _
            $region38: #{tpu_custom_call.1} parent=31 // pred_check_branch
              %217 = sbr.rel target = $region40
            $region39: #{tpu_custom_call.1} parent=31 // pred_region
              %s219 = ssub.s32 256, 1
              loop: start=0, step=1, limit=1
              $region41: #{tpu_custom_call.1} parent=39 // loop_pre_header
                _
              $region42: #{tpu_custom_call.1} parent=39 // loop_header
                %s221 = sphi 0, %s225
                %p222 = scmp.ge.s32.totalorder %s221, 1
                %s226 = sphi %s211, %s211
                %s227 = sphi %s207, %s207
              $region43: #{tpu_custom_call.1} parent=39 // loop_header_branch
                %224 = sbr.rel (%p222) target = $region47
              $region44: #{tpu_custom_call.1} parent=39 // loop_body
                %v228 = vld [vmem:[%s226] sm:%s219]
                %229 = vst [vmem:[%s227] sm:%s219] %v228
                %v230 = vld [vmem:[%s226 + $0x10] sm:%s219]
                %231 = vst [vmem:[%s227 + $0x8] sm:%s219] %v230
                %v232 = vld [vmem:[%s226 + $0x20] sm:%s219]
                %233 = vst [vmem:[%s227 + $0x10] sm:%s219] %v232
                %v234 = vld [vmem:[%s226 + $0x30] sm:%s219]
                %235 = vst [vmem:[%s227 + $0x18] sm:%s219] %v234
              $region45: #{tpu_custom_call.1} parent=39 // loop_footer
                %s225 = sadd.s32 1, %s221
              $region46: #{tpu_custom_call.1} parent=39 // loop_footer_branch
                %220 = sbr.rel target = $region42
              $region47: #{tpu_custom_call.1} parent=39 // loop_exit
                _
            $region40: #{tpu_custom_call.1} parent=31 // pred_fallthru
              _
          $region32: #{tpu_custom_call.1} parent=27 // pred_fallthru
            _
          %256 = vnop
        $region28: #{tpu_custom_call.1} parent=23 // pred_fallthru
          _
        // Predicated region
        $region63: #{tpu_custom_call.1} parent=23 // pred_check
          %p257 = pneg %p74
        $region64: #{tpu_custom_call.1} parent=23 // pred_check_branch
          %259 = sbr.rel (%p257) target = $region66
        $region65: #{tpu_custom_call.1} parent=23 // pred_region
          %p260 = scmp.lt.s32.totalorder %s21, 1
          %s261 = scalar_select %p260, %s21, 1
          %s262 = smul.addr %s261, 4
          %s263 = smul.addr %s262, 8
          %s264 = scalar_lea.vmem %s1, %s263
        $region66: #{tpu_custom_call.1} parent=23 // pred_fallthru
          _
        // Predicated region
        $region67: #{tpu_custom_call.1} parent=23 // pred_check
          %p265 = pneg %p100
        $region68: #{tpu_custom_call.1} parent=23 // pred_check_branch
          %267 = sbr.rel (%p265) target = $region70
        $region69: #{tpu_custom_call.1} parent=23 // pred_region
          %p268 = scmp.lt.s32.totalorder %s21, 1
          %s269 = scalar_select %p268, %s21, 1
          %s270 = smul.addr %s269, 4
          %s271 = smul.addr %s270, 8
          %s272 = scalar_lea.vmem %s2, %s271
        $region70: #{tpu_custom_call.1} parent=23 // pred_fallthru
          _
      $region24: #{tpu_custom_call.1} parent=5 // pred_fallthru
        _
      %p273 = scmp.le.s32.totalorder 1, %s14
      %p274 = scmp.lt.s32.totalorder %s14, 5
      %p275 = pnand %p273, %p274
      %p276 = pneg %p275
      // Predicated region
      $region71: #{tpu_custom_call.1} parent=5 // pred_check
        _
      $region72: #{tpu_custom_call.1} parent=5 // pred_check_branch
        %278 = sbr.rel (%p275) target = $region74
      $region73: #{tpu_custom_call.1} parent=5 // pred_region
        %s279 = ssub.s32 %s14, 1
        %s280 = sand.u32 %s41, 1
        %s281 = sand.u32 %s41, 1
        %s282 = smul.addr %s281, 32
        %s283 = scalar_lea.vmem [#allocation2], %s282
        // Predicated region
        $region75: #{tpu_custom_call.1} parent=73 // pred_check
          %p284 = pneg %p54
        $region76: #{tpu_custom_call.1} parent=73 // pred_check_branch
          %286 = sbr.rel (%p284) target = $region78
        $region77: #{tpu_custom_call.1} parent=73 // pred_region
          _
        $region78: #{tpu_custom_call.1} parent=73 // pred_fallthru
          _
        %s287 = sand.u32 %s41, 1
        %s288 = sand.u32 %s41, 1
        %s289 = smul.addr %s288, 32
        %s290 = scalar_lea.vmem [#allocation2], %s289
        %p291 = pneg %p54
        %p292 = pneg %p51
        %p293 = scmp.lt.s32.totalorder %s23, 1
        %s294 = scalar_select %p293, %s23, 1
        %s295 = smul.addr %s294, 4
        %s296 = smul.addr %s295, 8
        %s297 = scalar_lea.vmem %s1, %s296
        %p298 = pneg %p80
        %p299 = pneg %p77
        %p300 = scmp.lt.s32.totalorder %s23, 1
        %s301 = scalar_select %p300, %s23, 1
        %s302 = smul.addr %s301, 4
        %s303 = smul.addr %s302, 8
        %s304 = scalar_lea.vmem %s2, %s303
        %p305 = pneg %p106
        %p306 = pneg %p103
        %p307 = pneg %p127
        %p308 = pneg %p124
        %p309 = pneg %p148
        %p310 = pneg %p145
        %p311 = pneg %p176
        %p312 = pneg %p173
        %s313 = sand.u32 %s163, 1
        %s314 = scalar_lea.sflag [#allocation4], %s313
        %s315 = sand.u32 %s163, 1
        %s316 = smul.addr %s315, 16
        %s317 = scalar_lea.vmem [#allocation3], %s316
        %p318 = scmp.lt.s32.totalorder %s23, 1
        %s319 = scalar_select %p318, %s23, 1
        %s320 = smul.addr %s319, 4
        %s321 = smul.addr %s320, 8
        %s322 = scalar_lea.vmem %s1, %s321
        %p323 = scmp.lt.s32.totalorder %s23, 1
        %s324 = scalar_select %p323, %s23, 1
        %s325 = smul.addr %s324, 4
        %s326 = smul.addr %s325, 8
        %s327 = scalar_lea.vmem %s2, %s326
        %v329 = vld [vmem:[%s283] sm:$0xff]
        %v330 = vld [vmem:[%s283 + $0x8] sm:$0xff]
        %v331 = vld [vmem:[%s283 + $0x10] sm:$0xff]
        %v332 = vld [vmem:[%s283 + $0x18] sm:$0xff]
        %v333 = vadd.f32 %v329, %v330
        %v334 = vadd.f32 %v333, %v331
        %v335 = vadd.f32 %v334, %v332
        %v336 = vrot.slane %v335, 4
        %v337 = vadd.f32 %v335, %v336
        %v338 = vrot.slane %v337, 2
        %v339 = vadd.f32 %v337, %v338
        %v340 = vrot.slane %v339, 1
        %v341 = vadd.f32 %v339, %v340
        %v342 = vmul.f32 %v341, 0.03125
        %v343 = vmul.f32 %v329, %v329
        %v344 = vmul.f32 %v330, %v330
        %v345 = vmul.f32 %v331, %v331
        %v346 = vmul.f32 %v332, %v332
        %v347 = vadd.f32 %v343, %v344
        %v348 = vadd.f32 %v347, %v345
        %v349 = vadd.f32 %v348, %v346
        %v350 = vrot.slane %v349, 4
        %v351 = vadd.f32 %v349, %v350
        %v352 = vrot.slane %v351, 2
        %v353 = vadd.f32 %v351, %v352
        %v354 = vrot.slane %v353, 1
        %v355 = vadd.f32 %v353, %v354
        %v356 = vmul.f32 %v355, 0.03125
        %v357 = vmul.f32 %v342, %v342
        %v358 = vsub.f32 %v356, %v357
        %v359 = vmax.f32 %v358, 0.0
        %v360 = vadd.f32 %v359, 1e-06
        %v361 = vrsqrt.pop %v360
        %v362 = vmul.f32 %v361, %v360
        %v363 = vmul.f32 %v362, %v361
        %v364 = vmul.f32 0.5, %v363
        %v365 = vsub.f32 1.5, %v364
        %v366 = vmul.f32 %v361, %v365
        %vm367 = vweird.f32 %v360
        %vm368 = vweird.f32 %v361
        %vm369 = vmor %vm367, %vm368
        %v370 = vsel %vm369, %v361, %v366
        %v371 = vld [vmem:[%s322] sm:$0xff]
        %v372 = vld [vmem:[%s322 + $0x8] sm:$0xff]
        %v373 = vld [vmem:[%s322 + $0x10] sm:$0xff]
        %v374 = vld [vmem:[%s322 + $0x18] sm:$0xff]
        %v375 = vld [vmem:[%s327] sm:$0xff]
        %v376 = vld [vmem:[%s327 + $0x8] sm:$0xff]
        %v377 = vld [vmem:[%s327 + $0x10] sm:$0xff]
        %v378 = vld [vmem:[%s327 + $0x18] sm:$0xff]
        %380 = vset.pattern.permute.xlu0 0
        %381 = vperm.xlu0 %380, %v371
        %v382 = vpop.permute.xlu0 %381
        %385 = vset.pattern.permute.xlu0 0
        %386 = vperm.xlu0 %385, %v372
        %v387 = vpop.permute.xlu0 %386
        %390 = vset.pattern.permute.xlu0 0
        %391 = vperm.xlu0 %390, %v373
        %v392 = vpop.permute.xlu0 %391
        %395 = vset.pattern.permute.xlu0 0
        %396 = vperm.xlu0 %395, %v374
        %v397 = vpop.permute.xlu0 %396
        %v399 = vmul.f32 %v382, %v370
        %v400 = vmul.f32 %v387, %v370
        %v401 = vmul.f32 %v392, %v370
        %v402 = vmul.f32 %v397, %v370
        %v403 = vmul.f32 %v342, %v399
        %v404 = vmul.f32 %v342, %v400
        %v405 = vmul.f32 %v342, %v401
        %v406 = vmul.f32 %v342, %v402
        %408 = vset.pattern.permute.xlu0 0
        %409 = vperm.xlu0 %408, %v375
        %v410 = vpop.permute.xlu0 %409
        %413 = vset.pattern.permute.xlu0 0
        %414 = vperm.xlu0 %413, %v376
        %v415 = vpop.permute.xlu0 %414
        %418 = vset.pattern.permute.xlu0 0
        %419 = vperm.xlu0 %418, %v377
        %v420 = vpop.permute.xlu0 %419
        %423 = vset.pattern.permute.xlu0 0
        %424 = vperm.xlu0 %423, %v378
        %v425 = vpop.permute.xlu0 %424
        %v427 = vsub.f32 %v410, %v403
        %v428 = vsub.f32 %v415, %v404
        %v429 = vsub.f32 %v420, %v405
        %v430 = vsub.f32 %v425, %v406
        %v431 = vmul.f32 %v329, %v399
        %v432 = vmul.f32 %v330, %v400
        %v433 = vmul.f32 %v331, %v401
        %v434 = vmul.f32 %v332, %v402
        %v435 = vadd.f32 %v431, %v427
        %v436 = vadd.f32 %v432, %v428
        %v437 = vadd.f32 %v433, %v429
        %v438 = vadd.f32 %v434, %v430
        %v439 = vpack.c.bf16 %v436, %v435
        %v440 = vpack.c.bf16 %v438, %v437
        %v441 = vld [vmem:[%s3] sm:$0xf]
        %v442 = vld [vmem:[%s3 + $0x4] sm:$0xf]
        %v443 = vld [vmem:[%s4] sm:$0xff]
        %v444 = vld [vmem:[%s4 + $0x8] sm:$0xff]
        %446 = vset.pattern.permute.xlu0 0
        %447 = vperm.xlu0 %446, %v443
        %v448 = vpop.permute.xlu0 %447
        %451 = vset.pattern.permute.xlu0 0
        %452 = vperm.xlu0 %451, %v444
        %v453 = vpop.permute.xlu0 %452
        %v457 = vunpack.c.l.b16 %v441
        %v458 = vunpack.c.l.b16 %v442
        %v459 = vpack.c.b16 %v458, %v457
        %vm460 = vcmask 261120
        %v462 = vsel %vm460, %v459, 0
        %464 = vmatpush.bf16.msra.mxu0 0
        %465 = vmatpush.bf16.msra.mxu0 0
        %466 = vmatpush.bf16.msra.mxu0 0
        %467 = vmatpush.bf16.msra.mxu0 0
        %468 = vmatpush.bf16.msra.mxu0 0
        %469 = vmatpush.bf16.msra.mxu0 0
        %470 = vmatpush.bf16.msra.mxu0 %v440
        %471 = vmatpush.bf16.msra.mxu0 %v439
        %472 = vmatmul.bf16.gmra.mxu0 %v462
        %v473 = vpop.f32.mrf.mxu0
        %v474 = vadd.f32 %v448, %v473
        %v475 = vpop.f32.mrf.mxu0
        %v476 = vadd.f32 %v453, %v475
        %477 = vdwg.mxu0
        %478 = vst [vmem:[%s317] sm:$0xff] %v474
        %479 = vst [vmem:[%s317 + $0x8] sm:$0xff] %v476
        %s480 = sand.u32 %s163, 1
        %s481 = scalar_lea.sflag [#allocation4], %s480
        %s482 = sand.u32 %s163, 1
        %s483 = smul.addr %s482, 16
        %s484 = scalar_lea.vmem [#allocation3], %s483
        // Predicated region
        $region79: #{tpu_custom_call.1} parent=73 // pred_check
          %p485 = pneg %p173
        $region80: #{tpu_custom_call.1} parent=73 // pred_check_branch
          %487 = sbr.rel (%p485) target = $region82
        $region81: #{tpu_custom_call.1} parent=73 // pred_region
          %489 = vsyncadd %s481, 0
          %s490 = smul.addr %s23, 4
          %s491 = sadd.s32 %s24, %s490
          %s492 = smul.addr %s491, 8
          %s493 = scalar_lea.hbm %s5, %s492
          %s494 = sshll.u32 %s484, 4
          %s495 = int_to_ptr.vmem [resolvable:$true] %s494
          %s496 = sshll.u32 %s493, 4
          %s497 = int_to_ptr.hbm [resolvable:$true] %s496
          %502 = dma.vmem_to_hbm [thread:$0]  %s495, 256, %s497, %s481, 128, 256, 8
        $region82: #{tpu_custom_call.1} parent=73 // pred_fallthru
          _
      $region74: #{tpu_custom_call.1} parent=5 // pred_fallthru
        _
      %p503 = scmp.le.s32.totalorder 2, %s14
      // Predicated region
      $region83: #{tpu_custom_call.1} parent=5 // pred_check
        %p504 = pneg %p503
      $region84: #{tpu_custom_call.1} parent=5 // pred_check_branch
        %506 = sbr.rel (%p504) target = $region86
      $region85: #{tpu_custom_call.1} parent=5 // pred_region
        %s507 = ssub.s32 %s14, 2
        // Predicated region
        $region87: #{tpu_custom_call.1} parent=85 // pred_check
          %p508 = pneg %p179
        $region88: #{tpu_custom_call.1} parent=85 // pred_check_branch
          %510 = sbr.rel (%p508) target = $region90
        $region89: #{tpu_custom_call.1} parent=85 // pred_region
          %s511 = sand.u32 %s164, 1
          %s512 = scalar_lea.sflag [#allocation4], %s511
          %s513 = sand.u32 %s164, 1
          %s514 = smul.addr %s513, 16
          %s515 = scalar_lea.vmem [#allocation3], %s514
          %517 = dma.done %s512, 256
        $region90: #{tpu_custom_call.1} parent=85 // pred_fallthru
          _
      $region86: #{tpu_custom_call.1} parent=5 // pred_fallthru
        _
    $region6: #{tpu_custom_call.1} parent=1 // loop_footer
      %s18 = sadd.s32 1, %s14
    $region7: #{tpu_custom_call.1} parent=1 // loop_footer_branch
      %13 = sbr.rel target = $region3
    $region8: #{tpu_custom_call.1} parent=1 // loop_exit
      _
    %518 = vsyncpa [#allocation4], 1
    %s519 = scalar_lea.sflag [#allocation4], 1
    %520 = vsyncpa %s519, 1

</llo_original>
